<compile_context>
chip_gen: v6e
topology: v6e:2x2x1
jax: 0.10.0
libtpu: 0.0.40
codegen_flags: <defaults>
</compile_context>

<pallas_src>
import functools

import jax
import jax.numpy as jnp
from jax.experimental import pallas as pl
from jax.experimental.pallas import tpu as pltpu


def _round_up(x, m):
    return ((x + m - 1) // m) * m


def _disc_kernel(ha_ref, has_ref, hg_ref, hgs_ref, w_ref, b_ref, o_ref):
    """One row tile of the 4-way bilinear discriminator.

    Only two MXU projections are needed (h_attr @ W, h_attr_shfs @ W); the four
    logits are then row-wise dot products against h_graph / h_graph_shfs
    (VPU multiply + XLU lane reduce), all accumulated in f32.
    """
    w = w_ref[...].astype(jnp.bfloat16)                               # (F1p, F2p)
    b = b_ref[0, 0]                                                   # scalar (SMEM)
    hg = hg_ref[...].astype(jnp.float32)                              # (tm, F2p)
    hgs = hgs_ref[...].astype(jnp.float32)                            # (tm, F2p)

    # Projection 1 and its two logits first, then projection 2: only one f32
    # (tm, F2p) projection is live at a time -> less spill at large tm.
    p1 = jnp.dot(ha_ref[...].astype(jnp.bfloat16), w,
                 preferred_element_type=jnp.float32)                  # (tm, F2p) f32
    l1 = jnp.sum(p1 * hg, axis=-1, keepdims=True) + b                 # (tm, 1)
    l3 = jnp.sum(p1 * hgs, axis=-1, keepdims=True) + b

    p2 = jnp.dot(has_ref[...].astype(jnp.bfloat16), w,
                 preferred_element_type=jnp.float32)
    l2 = jnp.sum(p2 * hg, axis=-1, keepdims=True) + b
    l4 = jnp.sum(p2 * hgs, axis=-1, keepdims=True) + b

    # Narrow (tm, 4) output block: four single-lane masked column stores.
    # No VALU lane-scatter, 32x less f32 writeback than a (tm, 128) slab.
    o_ref[:, 0:1] = l1.astype(o_ref.dtype)
    o_ref[:, 1:2] = l2.astype(o_ref.dtype)
    o_ref[:, 2:3] = l3.astype(o_ref.dtype)
    o_ref[:, 3:4] = l4.astype(o_ref.dtype)


@functools.partial(jax.jit, static_argnames=("tm",))
def bilinear_discriminator(h_attr, h_attr_shfs, h_graph, h_graph_shfs, w, bias,
                           *, tm=512):
    """Forward pass of _Discriminator. Returns (B, 4) f32 logits."""
    B, F1 = h_attr.shape
    B2, F2 = h_graph.shape
    assert h_attr_shfs.shape == (B, F1)
    assert h_graph_shfs.shape == (B2, F2)
    assert B2 == B
    assert w.shape == (F1, F2)

    # Lane-dense / MXU-friendly feature padding (zeros are exact no-ops).
    f1p = _round_up(F1, 128)
    f2p = _round_up(F2, 128)

    # Row tile: as large as requested, but keep >= 2 grid steps when possible
    # so dimension_semantics=("parallel",) can shard tiles over v7x's 2 TCs.
    tm_eff = _round_up(min(tm, max(pl.cdiv(B, 2), 8)), 8)
    bp = _round_up(B, tm_eff)
    grid = (bp // tm_eff,)

    def maybe_pad(x, rows, cols):
        r, c = x.shape
        if r == rows and c == cols:
            return x  # true no-op: no wrapper-side HBM pass
        return jnp.pad(x, ((0, rows - r), (0, cols - c)))

    # No wrapper-side casts: the kernel casts LHS / W to bf16 in-VMEM.
    ha = maybe_pad(h_attr, bp, f1p)
    has_ = maybe_pad(h_attr_shfs, bp, f1p)
    hg = maybe_pad(h_graph, bp, f2p)
    hgs = maybe_pad(h_graph_shfs, bp, f2p)
    wp = maybe_pad(w, f1p, f2p)
    b2d = jnp.asarray(bias, jnp.float32).reshape(1, 1)

    in_bytes = max(ha.dtype.itemsize, has_.dtype.itemsize,
                   hg.dtype.itemsize, hgs.dtype.itemsize)

    # Scoped-VMEM budget for the chosen tile: double-buffered input/output
    # tiles, resident W, plus f32 intermediates; 2x headroom, capped under
    # v7x's 64 MiB physical VMEM.
    step_bytes = (2 * 2 * tm_eff * (f1p + f2p) * in_bytes    # 4 input tiles x 2 bufs
                  + 2 * tm_eff * 4 * 4                       # (tm, 4) out x 2 bufs
                  + 2 * f1p * f2p * wp.dtype.itemsize        # resident W
                  + 10 * tm_eff * f2p * 4)                   # f32 intermediates
    vmem_limit = int(min(max(2 * step_bytes, 32 * 1024 * 1024), 60 * 1024 * 1024))

    flops = 2 * 2 * bp * f1p * f2p + 4 * 2 * bp * f2p
    bytes_accessed = ((2 * bp * f1p + 2 * bp * f2p) * in_bytes
                      + f1p * f2p * wp.dtype.itemsize + bp * 4 * 4 + 4)
    cost = pl.CostEstimate(flops=flops, transcendentals=0,
                           bytes_accessed=bytes_accessed)

    # TODO(synk): for very large feature dims (F1 >~ 4096) add a K-reduction
    # grid axis ("arbitrary") with f32 scratch accumulators for p1/p2 instead
    # of keeping the whole (f1p, f2p) W block resident (v7x has 64 MiB VMEM).
    out = pl.pallas_call(
        _disc_kernel,
        out_shape=jax.ShapeDtypeStruct((bp, 4), jnp.float32),
        grid=grid,
        in_specs=[
            pl.BlockSpec((tm_eff, f1p), lambda i: (i, 0)),          # h_attr tile
            pl.BlockSpec((tm_eff, f1p), lambda i: (i, 0)),          # h_attr_shfs tile
            pl.BlockSpec((tm_eff, f2p), lambda i: (i, 0)),          # h_graph tile
            pl.BlockSpec((tm_eff, f2p), lambda i: (i, 0)),          # h_graph_shfs tile
            pl.BlockSpec((f1p, f2p), lambda i: (0, 0)),             # W resident
            pl.BlockSpec(memory_space=pltpu.MemorySpace.SMEM),      # bias scalar
        ],
        out_specs=pl.BlockSpec((tm_eff, 4), lambda i: (i, 0)),      # narrow logits
        compiler_params=pltpu.CompilerParams(
            dimension_semantics=("parallel",),
            vmem_limit_bytes=vmem_limit,
        ),
        cost_estimate=cost,
    )(ha, has_, hg, hgs, wp, b2d)

    return out[:B]


def _reference(ha, has_, hg, hgs, w, b):
    """Plain-JAX f32 reference of the same forward on the same operands."""
    ha = ha.astype(jnp.float32)
    has_ = has_.astype(jnp.float32)
    hg = hg.astype(jnp.float32)
    hgs = hgs.astype(jnp.float32)
    w = w.astype(jnp.float32)
    p1 = jnp.dot(ha, w, precision=jax.lax.Precision.HIGHEST)
    p2 = jnp.dot(has_, w, precision=jax.lax.Precision.HIGHEST)
    l1 = jnp.sum(p1 * hg, axis=-1)
    l2 = jnp.sum(p2 * hg, axis=-1)
    l3 = jnp.sum(p1 * hgs, axis=-1)
    l4 = jnp.sum(p2 * hgs, axis=-1)
    return jnp.stack([l1, l2, l3, l4], axis=-1) + b


if __name__ == "__main__":
    # Small, deterministic, MXU/lane-friendly problem.
    B = 256     # batch of node/graph summary embeddings
    F1 = 128    # in_feat1 (h_attr width)
    F2 = 128    # in_feat2 (h_graph width)

    key = jax.random.PRNGKey(0)
    k1, k2, k3, k4, kw = jax.random.split(key, 5)

    # Inputs are created in bf16 so the kernel (bf16 MXU projections) and the
    # f32 reference see the exact same operand values.
    h_attr = jax.random.normal(k1, (B, F1), jnp.float32).astype(jnp.bfloat16)
    h_attr_shfs = jax.random.normal(k2, (B, F1), jnp.float32).astype(jnp.bfloat16)
    h_graph = jax.random.normal(k3, (B, F2), jnp.float32).astype(jnp.bfloat16)
    h_graph_shfs = jax.random.normal(k4, (B, F2), jnp.float32).astype(jnp.bfloat16)

    # nn.Bilinear weight (1, F1, F2) xavier_uniform, squeezed to (F1, F2);
    # bias initialized to 0 as in weights_init.
    limit = float(jnp.sqrt(6.0 / (F1 * F2 + F2)))
    w = jax.random.uniform(kw, (F1, F2), jnp.float32, -limit, limit).astype(jnp.bfloat16)
    bias = jnp.zeros((1,), jnp.float32)

    out = bilinear_discriminator(h_attr, h_attr_shfs, h_graph, h_graph_shfs, w, bias)
    out = jax.block_until_ready(out)

    expected = _reference(h_attr, h_attr_shfs, h_graph, h_graph_shfs, w, bias)
    assert out.shape == (B, 4), out.shape
    assert jnp.allclose(out, expected, atol=1e-3, rtol=1e-3), float(
        jnp.max(jnp.abs(out - expected)))

    print("KERNEL_OK")
</pallas_src>

<mosaic_0001>
module attributes {stable_mosaic.version = 11 : i64} {
  func.func @_disc_kernel(%arg0: i32, %arg1: memref<128x128xbf16, #tpu.memory_space<vmem>>, %arg2: memref<128x128xbf16, #tpu.memory_space<vmem>>, %arg3: memref<128x128xbf16, #tpu.memory_space<vmem>>, %arg4: memref<128x128xbf16, #tpu.memory_space<vmem>>, %arg5: memref<128x128xbf16, #tpu.memory_space<vmem>>, %arg6: memref<1x1xf32, #tpu.memory_space<smem>>, %arg7: memref<128x4xf32, #tpu.memory_space<vmem>>) attributes {dimension_semantics = [#tpu.dimension_semantics<parallel>], iteration_bounds = array<i64: 2>, scalar_prefetch = 0 : i64, scratch_operands = 0 : i64, tpu.core_type = #tpu.core_type<tc>, window_params = [{transform_indices = @transform_0, window_bounds = array<i64: 128, 128>}, {transform_indices = @transform_1, window_bounds = array<i64: 128, 128>}, {transform_indices = @transform_2, window_bounds = array<i64: 128, 128>}, {transform_indices = @transform_3, window_bounds = array<i64: 128, 128>}, {pipeline_mode = #tpu.pipeline_mode<synchronous>, transform_indices = @transform_4, window_bounds = array<i64: 128, 128>}, {transform_indices = @transform_5, window_bounds = array<i64: 1, 1>}, {transform_indices = @transform_6, window_bounds = array<i64: 128, 4>}]} {
    %c0 = arith.constant 0 : index
    %c0_0 = arith.constant 0 : index
    %0 = vector.load %arg5[%c0, %c0_0] : memref<128x128xbf16, #tpu.memory_space<vmem>>, vector<128x128xbf16>
    %c0_1 = arith.constant 0 : index
    %c0_2 = arith.constant 0 : index
    %1 = memref.load %arg6[%c0_1, %c0_2] : memref<1x1xf32, #tpu.memory_space<smem>>
    %c0_3 = arith.constant 0 : index
    %c0_4 = arith.constant 0 : index
    %2 = vector.load %arg3[%c0_3, %c0_4] : memref<128x128xbf16, #tpu.memory_space<vmem>>, vector<128x128xbf16>
    %3 = arith.extf %2 : vector<128x128xbf16> to vector<128x128xf32>
    %c0_5 = arith.constant 0 : index
    %c0_6 = arith.constant 0 : index
    %4 = vector.load %arg4[%c0_5, %c0_6] : memref<128x128xbf16, #tpu.memory_space<vmem>>, vector<128x128xbf16>
    %5 = arith.extf %4 : vector<128x128xbf16> to vector<128x128xf32>
    %c0_7 = arith.constant 0 : index
    %c0_8 = arith.constant 0 : index
    %6 = vector.load %arg1[%c0_7, %c0_8] : memref<128x128xbf16, #tpu.memory_space<vmem>>, vector<128x128xbf16>
    %cst = arith.constant dense<0.000000e+00> : vector<128x128xf32>
    %7 = tpu.matmul %6, %0, %cst {dimension_numbers = #tpu.dot_dimension_numbers<[1], [0], [0], [1], [0, 0, 1, 1], [], []>} : vector<128x128xbf16>, vector<128x128xbf16>, vector<128x128xf32> -> vector<128x128xf32>
    %8 = arith.mulf %7, %3 : vector<128x128xf32>
    %cst_9 = arith.constant dense<0.000000e+00> : vector<128xf32>
    %9 = vector.multi_reduction <add>, %8, %cst_9 [1] : vector<128x128xf32> to vector<128xf32>
    %10 = vector.shape_cast %9 : vector<128xf32> to vector<128x1xf32>
    %11 = vector.broadcast %1 : f32 to vector<128x1xf32>
    %12 = arith.addf %10, %11 : vector<128x1xf32>
    %13 = arith.mulf %7, %5 : vector<128x128xf32>
    %cst_10 = arith.constant dense<0.000000e+00> : vector<128xf32>
    %14 = vector.multi_reduction <add>, %13, %cst_10 [1] : vector<128x128xf32> to vector<128xf32>
    %15 = vector.shape_cast %14 : vector<128xf32> to vector<128x1xf32>
    %16 = vector.broadcast %1 : f32 to vector<128x1xf32>
    %17 = arith.addf %15, %16 : vector<128x1xf32>
    %c0_11 = arith.constant 0 : index
    %c0_12 = arith.constant 0 : index
    %18 = vector.load %arg2[%c0_11, %c0_12] : memref<128x128xbf16, #tpu.memory_space<vmem>>, vector<128x128xbf16>
    %cst_13 = arith.constant dense<0.000000e+00> : vector<128x128xf32>
    %19 = tpu.matmul %18, %0, %cst_13 {dimension_numbers = #tpu.dot_dimension_numbers<[1], [0], [0], [1], [0, 0, 1, 1], [], []>} : vector<128x128xbf16>, vector<128x128xbf16>, vector<128x128xf32> -> vector<128x128xf32>
    %20 = arith.mulf %19, %3 : vector<128x128xf32>
    %cst_14 = arith.constant dense<0.000000e+00> : vector<128xf32>
    %21 = vector.multi_reduction <add>, %20, %cst_14 [1] : vector<128x128xf32> to vector<128xf32>
    %22 = vector.shape_cast %21 : vector<128xf32> to vector<128x1xf32>
    %23 = vector.broadcast %1 : f32 to vector<128x1xf32>
    %24 = arith.addf %22, %23 : vector<128x1xf32>
    %25 = arith.mulf %19, %5 : vector<128x128xf32>
    %cst_15 = arith.constant dense<0.000000e+00> : vector<128xf32>
    %26 = vector.multi_reduction <add>, %25, %cst_15 [1] : vector<128x128xf32> to vector<128xf32>
    %27 = vector.shape_cast %26 : vector<128xf32> to vector<128x1xf32>
    %28 = vector.broadcast %1 : f32 to vector<128x1xf32>
    %29 = arith.addf %27, %28 : vector<128x1xf32>
    %c0_16 = arith.constant 0 : index
    %c0_17 = arith.constant 0 : index
    %30 = vector.load %arg7[%c0_16, %c0_17] : memref<128x4xf32, #tpu.memory_space<vmem>>, vector<128x1xf32>
    tpu.vector_store %arg7[%c0_16, %c0_17], %12 {strides = array<i32>} : memref<128x4xf32, #tpu.memory_space<vmem>>, vector<128x1xf32>,
    %c0_18 = arith.constant 0 : index
    %c1 = arith.constant 1 : index
    %31 = vector.load %arg7[%c0_18, %c1] : memref<128x4xf32, #tpu.memory_space<vmem>>, vector<128x1xf32>
    tpu.vector_store %arg7[%c0_18, %c1], %24 {strides = array<i32>} : memref<128x4xf32, #tpu.memory_space<vmem>>, vector<128x1xf32>,
    %c0_19 = arith.constant 0 : index
    %c2 = arith.constant 2 : index
    %32 = vector.load %arg7[%c0_19, %c2] : memref<128x4xf32, #tpu.memory_space<vmem>>, vector<128x1xf32>
    tpu.vector_store %arg7[%c0_19, %c2], %17 {strides = array<i32>} : memref<128x4xf32, #tpu.memory_space<vmem>>, vector<128x1xf32>,
    %c0_20 = arith.constant 0 : index
    %c3 = arith.constant 3 : index
    %33 = vector.load %arg7[%c0_20, %c3] : memref<128x4xf32, #tpu.memory_space<vmem>>, vector<128x1xf32>
    tpu.vector_store %arg7[%c0_20, %c3], %29 {strides = array<i32>} : memref<128x4xf32, #tpu.memory_space<vmem>>, vector<128x1xf32>,
    return
  }
  func.func @transform_0(%arg0: i32) -> (i32, i32) {
    %c0_i32 = arith.constant 0 : i32
    %c0_i32_0 = arith.constant 0 : i32
    return %arg0, %c0_i32 : i32, i32
  }
  func.func @transform_1(%arg0: i32) -> (i32, i32) {
    %c0_i32 = arith.constant 0 : i32
    %c0_i32_0 = arith.constant 0 : i32
    return %arg0, %c0_i32 : i32, i32
  }
  func.func @transform_2(%arg0: i32) -> (i32, i32) {
    %c0_i32 = arith.constant 0 : i32
    %c0_i32_0 = arith.constant 0 : i32
    return %arg0, %c0_i32 : i32, i32
  }
  func.func @transform_3(%arg0: i32) -> (i32, i32) {
    %c0_i32 = arith.constant 0 : i32
    %c0_i32_0 = arith.constant 0 : i32
    return %arg0, %c0_i32 : i32, i32
  }
  func.func @transform_4(%arg0: i32) -> (i32, i32) {
    %c0_i32 = arith.constant 0 : i32
    %c0_i32_0 = arith.constant 0 : i32
    %c0_i32_1 = arith.constant 0 : i32
    return %c0_i32, %c0_i32_0 : i32, i32
  }
  func.func @transform_5(%arg0: i32) -> (i32, i32) {
    %c0_i32 = arith.constant 0 : i32
    %c0_i32_0 = arith.constant 0 : i32
    %c0_i32_1 = arith.constant 0 : i32
    return %c0_i32, %c0_i32_0 : i32, i32
  }
  func.func @transform_6(%arg0: i32) -> (i32, i32) {
    %c0_i32 = arith.constant 0 : i32
    %c0_i32_0 = arith.constant 0 : i32
    return %arg0, %c0_i32 : i32, i32
  }
}

</mosaic_0001>

<llo_original>
// kernel: bilinear_discriminator.1
$region0: #{bilinear_discriminator.1}
  #allocation0 [shape = 'u32[]', space=smem, size = 0x4, offset = 0x4, fixed_abs, tag = 'smem constant byte address 0x4 - core index']
  #allocation1 [shape = 'u32[144,128]{1,0:T(1,128)}', space=vmem, size = 0x12000, scoped, tag = 'internal scratch']
  #allocation2 [shape = 'f32[1,1]{1,0:T(1,128)S(6)}', space=smem, size = 0x200, scoped, tag = 'scoped memory for bilinear_discriminator.1']
  %s0 = inlined_call_operand.hbm [shape: bf16[256,128], index: 0, kind: input, shape index: {}]
  %s1 = inlined_call_operand.hbm [shape: bf16[256,128], index: 1, kind: input, shape index: {}]
  %s2 = inlined_call_operand.hbm [shape: bf16[256,128], index: 2, kind: input, shape index: {}]
  %s3 = inlined_call_operand.hbm [shape: bf16[256,128], index: 3, kind: input, shape index: {}]
  %s4 = inlined_call_operand.hbm [shape: bf16[128,128], index: 4, kind: input, shape index: {}]
  %s5 = inlined_call_operand.<no memory space> [shape: f32[1,1], index: 5, kind: input, shape index: {}]
  %s6 = inlined_call_operand.vmem [shape: f32[256,4], index: 6, kind: output, shape index: {}]
  %s7 = sld [smem:[#allocation0]]
  $region77: #{bilinear_discriminator.1} parent=0
    _
  %s9 = ssub.s32 1, %s7
  %s10 = scalar_select 0, %s9, %s7
  %11 = sst [smem:[#allocation2]] %s5
  $region1: #{bilinear_discriminator.1} parent=0
    #allocation3 [shape = 'u8[65536]{0}', space=vmem, size = 0x10000, scoped, tag = 'input window, operand 0']
    #allocation4 [shape = 's32[2]{0}', space=sflag, size = 0x8, scoped, tag = 'scoped memory for bilinear_discriminator.1']
    #allocation5 [shape = 'u8[65536]{0}', space=vmem, size = 0x10000, scoped, tag = 'input window, operand 1']
    #allocation6 [shape = 's32[2]{0}', space=sflag, size = 0x8, scoped, tag = 'scoped memory for bilinear_discriminator.1']
    #allocation7 [shape = 'u8[65536]{0}', space=vmem, size = 0x10000, scoped, tag = 'input window, operand 2']
    #allocation8 [shape = 'u8[65536]{0}', space=vmem, size = 0x10000, scoped, tag = 'input window, operand 3']
    #allocation9 [shape = 's32[2]{0}', space=sflag, size = 0x8, scoped, tag = 'scoped memory for bilinear_discriminator.1']
    #allocation10 [shape = 'u8[32768]{0}', space=vmem, size = 0x8000, scoped, tag = 'input window, operand 4, single buffered']
    %12 = vsyncpa [#allocation4], 0
    %s13 = scalar_lea.sflag [#allocation4], 1
    %14 = vsyncpa %s13, 0
    %15 = vsyncpa [#allocation6], 0
    %s16 = scalar_lea.sflag [#allocation6], 1
    %17 = vsyncpa %s16, 0
    %18 = vsyncpa [#allocation9], 0
    %s19 = scalar_lea.sflag [#allocation9], 1
    %20 = vsyncpa %s19, 0
    loop: start=0, step=1, limit=4
    $region2: #{bilinear_discriminator.1} parent=1 // loop_pre_header
      _
    $region3: #{bilinear_discriminator.1} parent=1 // loop_header
      %s22 = sphi 0, %s26
      %p23 = scmp.ge.s32.totalorder %s22, 4
      %s32 = sphi 0, %s34
      %s35 = sphi 0, %s32
      %s36 = sphi 0, %s35
      %s52 = sphi 0, %s36
      %s58 = sphi 0, %s60
      %s61 = sphi 0, %s58
      %s62 = sphi 0, %s61
      %s78 = sphi 0, %s62
      %s84 = sphi 0, %s86
      %s87 = sphi 0, %s84
      %s88 = sphi 0, %s87
      %s104 = sphi 0, %s88
      %s110 = sphi 0, %s112
      %s113 = sphi 0, %s110
      %s114 = sphi 0, %s113
      %s130 = sphi 0, %s114
      %s134 = sphi 0, %s134
      %s136 = sphi 0, %s134
      %s137 = sphi 0, %s136
      %s151 = sphi 0, %s137
      %s155 = sphi 0, %s155
      %s157 = sphi 0, %s155
      %s158 = sphi 0, %s157
      %s172 = sphi 0, %s158
      %s178 = sphi 0, %s180
      %s181 = sphi 0, %s178
      %s182 = sphi 0, %s181
      %s198 = sphi 0, %s182
    $region4: #{bilinear_discriminator.1} parent=1 // loop_header_branch
      %25 = sbr.rel (%p23) target = $region8
    $region5: #{bilinear_discriminator.1} parent=1 // loop_body
      %s27 = ssub.s32 %s22, 1
      %s28 = ssub.s32 %s22, 2
      %s29 = sadd.s32 %s22, 1
      %s30 = ssub.s32 %s22, %s29
      %p31 = scmp.eq.s32.totalorder %s30, 0
      %s33 = sadd.s32 %s32, 1
      %s34 = scalar_select %p31, %s32, %s33
      %p37 = pneg %p31
      %p38 = scmp.eq.s32.totalorder %s22, 1
      %p39 = por %p37, %p38
      %p40 = scmp.ne.s32.totalorder %s32, %s35
      %p41 = scmp.eq.s32.totalorder %s22, 0
      %p42 = por %p40, %p41
      %p43 = scmp.ne.s32.totalorder %s32, %s35
      %p44 = scmp.eq.s32.totalorder %s27, 1
      %p45 = por %p43, %p44
      %p46 = scmp.ne.s32.totalorder %s35, %s36
      %p47 = scmp.eq.s32.totalorder %s27, 0
      %p48 = por %p46, %p47
      %p49 = scmp.ne.s32.totalorder %s35, %s36
      %p50 = scmp.eq.s32.totalorder %s28, 1
      %p51 = por %p49, %p50
      %p53 = scmp.ne.s32.totalorder %s36, %s52
      %p54 = scmp.eq.s32.totalorder %s28, 0
      %p55 = por %p53, %p54
      %s56 = ssub.s32 %s22, %s29
      %p57 = scmp.eq.s32.totalorder %s56, 0
      %s59 = sadd.s32 %s58, 1
      %s60 = scalar_select %p57, %s58, %s59
      %p63 = pneg %p57
      %p64 = scmp.eq.s32.totalorder %s22, 1
      %p65 = por %p63, %p64
      %p66 = scmp.ne.s32.totalorder %s58, %s61
      %p67 = scmp.eq.s32.totalorder %s22, 0
      %p68 = por %p66, %p67
      %p69 = scmp.ne.s32.totalorder %s58, %s61
      %p70 = scmp.eq.s32.totalorder %s27, 1
      %p71 = por %p69, %p70
      %p72 = scmp.ne.s32.totalorder %s61, %s62
      %p73 = scmp.eq.s32.totalorder %s27, 0
      %p74 = por %p72, %p73
      %p75 = scmp.ne.s32.totalorder %s61, %s62
      %p76 = scmp.eq.s32.totalorder %s28, 1
      %p77 = por %p75, %p76
      %p79 = scmp.ne.s32.totalorder %s62, %s78
      %p80 = scmp.eq.s32.totalorder %s28, 0
      %p81 = por %p79, %p80
      %s82 = ssub.s32 %s22, %s29
      %p83 = scmp.eq.s32.totalorder %s82, 0
      %s85 = sadd.s32 %s84, 1
      %s86 = scalar_select %p83, %s84, %s85
      %p89 = pneg %p83
      %p90 = scmp.eq.s32.totalorder %s22, 1
      %p91 = por %p89, %p90
      %p92 = scmp.ne.s32.totalorder %s84, %s87
      %p93 = scmp.eq.s32.totalorder %s22, 0
      %p94 = por %p92, %p93
      %p95 = scmp.ne.s32.totalorder %s84, %s87
      %p96 = scmp.eq.s32.totalorder %s27, 1
      %p97 = por %p95, %p96
      %p98 = scmp.ne.s32.totalorder %s87, %s88
      %p99 = scmp.eq.s32.totalorder %s27, 0
      %p100 = por %p98, %p99
      %p101 = scmp.ne.s32.totalorder %s87, %s88
      %p102 = scmp.eq.s32.totalorder %s28, 1
      %p103 = por %p101, %p102
      %p105 = scmp.ne.s32.totalorder %s88, %s104
      %p106 = scmp.eq.s32.totalorder %s28, 0
      %p107 = por %p105, %p106
      %s108 = ssub.s32 %s22, %s29
      %p109 = scmp.eq.s32.totalorder %s108, 0
      %s111 = sadd.s32 %s110, 1
      %s112 = scalar_select %p109, %s110, %s111
      %p115 = pneg %p109
      %p116 = scmp.eq.s32.totalorder %s22, 1
      %p117 = por %p115, %p116
      %p118 = scmp.ne.s32.totalorder %s110, %s113
      %p119 = scmp.eq.s32.totalorder %s22, 0
      %p120 = por %p118, %p119
      %p121 = scmp.ne.s32.totalorder %s110, %s113
      %p122 = scmp.eq.s32.totalorder %s27, 1
      %p123 = por %p121, %p122
      %p124 = scmp.ne.s32.totalorder %s113, %s114
      %p125 = scmp.eq.s32.totalorder %s27, 0
      %p126 = por %p124, %p125
      %p127 = scmp.ne.s32.totalorder %s113, %s114
      %p128 = scmp.eq.s32.totalorder %s28, 1
      %p129 = por %p127, %p128
      %p131 = scmp.ne.s32.totalorder %s114, %s130
      %p132 = scmp.eq.s32.totalorder %s28, 0
      %p133 = por %p131, %p132
      %s135 = sadd.s32 %s134, 1
      %p138 = scmp.eq.s32.totalorder %s22, 1
      %p139 = scmp.ne.s32.totalorder %s134, %s136
      %p140 = scmp.eq.s32.totalorder %s22, 0
      %p141 = por %p139, %p140
      %p142 = scmp.ne.s32.totalorder %s134, %s136
      %p143 = scmp.eq.s32.totalorder %s27, 1
      %p144 = por %p142, %p143
      %p145 = scmp.ne.s32.totalorder %s136, %s137
      %p146 = scmp.eq.s32.totalorder %s27, 0
      %p147 = por %p145, %p146
      %p148 = scmp.ne.s32.totalorder %s136, %s137
      %p149 = scmp.eq.s32.totalorder %s28, 1
      %p150 = por %p148, %p149
      %p152 = scmp.ne.s32.totalorder %s137, %s151
      %p153 = scmp.eq.s32.totalorder %s28, 0
      %p154 = por %p152, %p153
      %s156 = sadd.s32 %s155, 1
      %p159 = scmp.eq.s32.totalorder %s22, 1
      %p160 = scmp.ne.s32.totalorder %s155, %s157
      %p161 = scmp.eq.s32.totalorder %s22, 0
      %p162 = por %p160, %p161
      %p163 = scmp.ne.s32.totalorder %s155, %s157
      %p164 = scmp.eq.s32.totalorder %s27, 1
      %p165 = por %p163, %p164
      %p166 = scmp.ne.s32.totalorder %s157, %s158
      %p167 = scmp.eq.s32.totalorder %s27, 0
      %p168 = por %p166, %p167
      %p169 = scmp.ne.s32.totalorder %s157, %s158
      %p170 = scmp.eq.s32.totalorder %s28, 1
      %p171 = por %p169, %p170
      %p173 = scmp.ne.s32.totalorder %s158, %s172
      %p174 = scmp.eq.s32.totalorder %s28, 0
      %p175 = por %p173, %p174
      %s176 = ssub.s32 %s22, %s29
      %p177 = scmp.eq.s32.totalorder %s176, 0
      %s179 = sadd.s32 %s178, 1
      %s180 = scalar_select %p177, %s178, %s179
      %p183 = pneg %p177
      %p184 = scmp.eq.s32.totalorder %s22, 1
      %p185 = por %p183, %p184
      %p186 = scmp.ne.s32.totalorder %s178, %s181
      %p187 = scmp.eq.s32.totalorder %s22, 0
      %p188 = por %p186, %p187
      %p189 = scmp.ne.s32.totalorder %s178, %s181
      %p190 = scmp.eq.s32.totalorder %s27, 1
      %p191 = por %p189, %p190
      %p192 = scmp.ne.s32.totalorder %s181, %s182
      %p193 = scmp.eq.s32.totalorder %s27, 0
      %p194 = por %p192, %p193
      %p195 = scmp.ne.s32.totalorder %s181, %s182
      %p196 = scmp.eq.s32.totalorder %s28, 1
      %p197 = por %p195, %p196
      %p199 = scmp.ne.s32.totalorder %s182, %s198
      %p200 = scmp.eq.s32.totalorder %s28, 0
      %p201 = por %p199, %p200
      %p202 = scmp.le.s32.totalorder 1, %s22
      %p203 = scmp.lt.s32.totalorder %s22, 3
      %p204 = pnand %p202, %p203
      %p205 = pneg %p204
      // Predicated region
      $region9: #{bilinear_discriminator.1} parent=5 // pred_check
        _
      $region10: #{bilinear_discriminator.1} parent=5 // pred_check_branch
        %207 = sbr.rel (%p204) target = $region12
      $region11: #{bilinear_discriminator.1} parent=5 // pred_region
        %s208 = ssub.s32 %s22, 1
        // Predicated region
        $region13: #{bilinear_discriminator.1} parent=11 // pred_check
          %p209 = pneg %p147
        $region14: #{bilinear_discriminator.1} parent=11 // pred_check_branch
          %211 = sbr.rel (%p209) target = $region16
        $region15: #{bilinear_discriminator.1} parent=11 // pred_region
          %s213 = ssub.s32 1024, 1024
          %214 = vsyncadd [#allocation9], %s213
          %s215 = sshll.u32 [#allocation10], 4
          %s216 = int_to_ptr.vmem [resolvable:$true] %s215
          %221 = dma.hbm_to_vmem [thread:$0]  %s4, 1024, %s216, [#allocation9], 64, 64, 4
        $region16: #{bilinear_discriminator.1} parent=11 // pred_fallthru
          _
        // Predicated region
        $region17: #{bilinear_discriminator.1} parent=11 // pred_check
          %p222 = pneg %p168
        $region18: #{bilinear_discriminator.1} parent=11 // pred_check_branch
          %224 = sbr.rel (%p222) target = $region20
        $region19: #{bilinear_discriminator.1} parent=11 // pred_region
          _
        $region20: #{bilinear_discriminator.1} parent=11 // pred_fallthru
          _
      $region12: #{bilinear_discriminator.1} parent=5 // pred_fallthru
        _
      %p225 = scmp.lt.s32.totalorder %s22, 2
      // Predicated region
      $region21: #{bilinear_discriminator.1} parent=5 // pred_check
        %p226 = pneg %p225
      $region22: #{bilinear_discriminator.1} parent=5 // pred_check_branch
        %228 = sbr.rel (%p226) target = $region24
      $region23: #{bilinear_discriminator.1} parent=5 // pred_region
        // Predicated region
        $region25: #{bilinear_discriminator.1} parent=23 // pred_check
          %p229 = pneg %p42
        $region26: #{bilinear_discriminator.1} parent=23 // pred_check_branch
          %231 = sbr.rel (%p229) target = $region28
        $region27: #{bilinear_discriminator.1} parent=23 // pred_region
          %s232 = sand.u32 %s32, 1
          %s233 = scalar_lea.sflag [#allocation4], %s232
          %s234 = sand.u32 %s32, 1
          %s235 = smul.addr %s234, 64
          %s236 = scalar_lea.vmem [#allocation3], %s235
          %s237 = smul.u32 16, %s22
          %s239 = ssub.s32 1024, 1024
          %240 = vsyncadd %s233, %s239
          %s241 = smul.addr %s237, 64
          %s242 = scalar_lea.hbm %s0, %s241
          %s243 = sshll.u32 %s236, 4
          %s244 = int_to_ptr.vmem [resolvable:$true] %s243
          %249 = dma.hbm_to_vmem [thread:$0]  %s242, 1024, %s244, %s233, 64, 64, 4
        $region28: #{bilinear_discriminator.1} parent=23 // pred_fallthru
          _
        // Predicated region
        $region29: #{bilinear_discriminator.1} parent=23 // pred_check
          %p250 = pneg %p68
        $region30: #{bilinear_discriminator.1} parent=23 // pred_check_branch
          %252 = sbr.rel (%p250) target = $region32
        $region31: #{bilinear_discriminator.1} parent=23 // pred_region
          %s253 = sand.u32 %s22, 1
          %s254 = scalar_lea.sflag [#allocation6], %s253
          %s255 = sand.u32 %s58, 1
          %s256 = smul.addr %s255, 64
          %s257 = scalar_lea.vmem [#allocation5], %s256
          %s258 = smul.u32 16, %s22
          %s260 = ssub.s32 1024, 1024
          %261 = vsyncadd %s254, %s260
          %s262 = smul.addr %s258, 64
          %s263 = scalar_lea.hbm %s1, %s262
          %s264 = sshll.u32 %s257, 4
          %s265 = int_to_ptr.vmem [resolvable:$true] %s264
          %270 = dma.hbm_to_vmem [thread:$0]  %s263, 1024, %s265, %s254, 64, 64, 4
        $region32: #{bilinear_discriminator.1} parent=23 // pred_fallthru
          _
        // Predicated region
        $region33: #{bilinear_discriminator.1} parent=23 // pred_check
          %p271 = pneg %p94
        $region34: #{bilinear_discriminator.1} parent=23 // pred_check_branch
          %273 = sbr.rel (%p271) target = $region36
        $region35: #{bilinear_discriminator.1} parent=23 // pred_region
          %s274 = sand.u32 %s22, 1
          %s275 = scalar_lea.sflag [#allocation6], %s274
          %s276 = sand.u32 %s84, 1
          %s277 = smul.addr %s276, 64
          %s278 = scalar_lea.vmem [#allocation7], %s277
          %s279 = smul.u32 16, %s22
          %s281 = ssub.s32 1024, 1024
          %282 = vsyncadd %s275, %s281
          %s283 = smul.addr %s279, 64
          %s284 = scalar_lea.hbm %s2, %s283
          %s285 = sshll.u32 %s278, 4
          %s286 = int_to_ptr.vmem [resolvable:$true] %s285
          %291 = dma.hbm_to_vmem [thread:$0]  %s284, 1024, %s286, %s275, 64, 64, 4
        $region36: #{bilinear_discriminator.1} parent=23 // pred_fallthru
          _
        // Predicated region
        $region37: #{bilinear_discriminator.1} parent=23 // pred_check
          %p292 = pneg %p120
        $region38: #{bilinear_discriminator.1} parent=23 // pred_check_branch
          %294 = sbr.rel (%p292) target = $region40
        $region39: #{bilinear_discriminator.1} parent=23 // pred_region
          %s295 = sand.u32 %s22, 1
          %s296 = scalar_lea.sflag [#allocation9], %s295
          %s297 = sand.u32 %s110, 1
          %s298 = smul.addr %s297, 64
          %s299 = scalar_lea.vmem [#allocation8], %s298
          %s300 = smul.u32 16, %s22
          %s302 = ssub.s32 1024, 1024
          %303 = vsyncadd %s296, %s302
          %s304 = smul.addr %s300, 64
          %s305 = scalar_lea.hbm %s3, %s304
          %s306 = sshll.u32 %s299, 4
          %s307 = int_to_ptr.vmem [resolvable:$true] %s306
          %312 = dma.hbm_to_vmem [thread:$0]  %s305, 1024, %s307, %s296, 64, 64, 4
        $region40: #{bilinear_discriminator.1} parent=23 // pred_fallthru
          _
      $region24: #{bilinear_discriminator.1} parent=5 // pred_fallthru
        _
      %p313 = scmp.le.s32.totalorder 1, %s22
      %p314 = scmp.lt.s32.totalorder %s22, 3
      %p315 = pnand %p313, %p314
      %p316 = pneg %p315
      // Predicated region
      $region41: #{bilinear_discriminator.1} parent=5 // pred_check
        _
      $region42: #{bilinear_discriminator.1} parent=5 // pred_check_branch
        %318 = sbr.rel (%p315) target = $region44
      $region43: #{bilinear_discriminator.1} parent=5 // pred_region
        %s319 = ssub.s32 %s22, 1
        %s320 = sand.u32 %s35, 1
        %s321 = scalar_lea.sflag [#allocation4], %s320
        %s322 = sand.u32 %s35, 1
        %s323 = smul.addr %s322, 64
        %s324 = scalar_lea.vmem [#allocation3], %s323
        // Predicated region
        $region45: #{bilinear_discriminator.1} parent=43 // pred_check
          %p325 = pneg %p48
        $region46: #{bilinear_discriminator.1} parent=43 // pred_check_branch
          %327 = sbr.rel (%p325) target = $region48
        $region47: #{bilinear_discriminator.1} parent=43 // pred_region
          %328 = dma.done %s321, 1024
        $region48: #{bilinear_discriminator.1} parent=43 // pred_fallthru
          _
        %s329 = sand.u32 %s27, 1
        %s330 = scalar_lea.sflag [#allocation6], %s329
        %s331 = sand.u32 %s61, 1
        %s332 = smul.addr %s331, 64
        %s333 = scalar_lea.vmem [#allocation5], %s332
        // Predicated region
        $region49: #{bilinear_discriminator.1} parent=43 // pred_check
          %p334 = pneg %p74
        $region50: #{bilinear_discriminator.1} parent=43 // pred_check_branch
          %336 = sbr.rel (%p334) target = $region52
        $region51: #{bilinear_discriminator.1} parent=43 // pred_region
          %337 = dma.done %s330, 1024
        $region52: #{bilinear_discriminator.1} parent=43 // pred_fallthru
          _
        %s338 = sand.u32 %s27, 1
        %s339 = scalar_lea.sflag [#allocation6], %s338
        %s340 = sand.u32 %s87, 1
        %s341 = smul.addr %s340, 64
        %s342 = scalar_lea.vmem [#allocation7], %s341
        // Predicated region
        $region53: #{bilinear_discriminator.1} parent=43 // pred_check
          %p343 = pneg %p100
        $region54: #{bilinear_discriminator.1} parent=43 // pred_check_branch
          %345 = sbr.rel (%p343) target = $region56
        $region55: #{bilinear_discriminator.1} parent=43 // pred_region
          %346 = dma.done %s339, 1024
        $region56: #{bilinear_discriminator.1} parent=43 // pred_fallthru
          _
        %s347 = sand.u32 %s27, 1
        %s348 = scalar_lea.sflag [#allocation9], %s347
        %s349 = sand.u32 %s113, 1
        %s350 = smul.addr %s349, 64
        %s351 = scalar_lea.vmem [#allocation8], %s350
        // Predicated region
        $region57: #{bilinear_discriminator.1} parent=43 // pred_check
          %p352 = pneg %p126
        $region58: #{bilinear_discriminator.1} parent=43 // pred_check_branch
          %354 = sbr.rel (%p352) target = $region60
        $region59: #{bilinear_discriminator.1} parent=43 // pred_region
          %355 = dma.done %s348, 1024
        $region60: #{bilinear_discriminator.1} parent=43 // pred_fallthru
          _
        // Predicated region
        $region61: #{bilinear_discriminator.1} parent=43 // pred_check
          %p356 = pneg %p147
        $region62: #{bilinear_discriminator.1} parent=43 // pred_check_branch
          %358 = sbr.rel (%p356) target = $region64
        $region63: #{bilinear_discriminator.1} parent=43 // pred_region
          %359 = dma.done [#allocation9], 1024
        $region64: #{bilinear_discriminator.1} parent=43 // pred_fallthru
          _
        %s360 = sand.u32 %s35, 1
        %s361 = scalar_lea.sflag [#allocation4], %s360
        %s362 = sand.u32 %s35, 1
        %s363 = smul.addr %s362, 64
        %s364 = scalar_lea.vmem [#allocation3], %s363
        %p365 = pneg %p48
        %p366 = pneg %p45
        %s367 = sand.u32 %s27, 1
        %s368 = scalar_lea.sflag [#allocation6], %s367
        %s369 = sand.u32 %s61, 1
        %s370 = smul.addr %s369, 64
        %s371 = scalar_lea.vmem [#allocation5], %s370
        %p372 = pneg %p74
        %p373 = pneg %p71
        %s374 = sand.u32 %s27, 1
        %s375 = scalar_lea.sflag [#allocation6], %s374
        %s376 = sand.u32 %s87, 1
        %s377 = smul.addr %s376, 64
        %s378 = scalar_lea.vmem [#allocation7], %s377
        %p379 = pneg %p100
        %p380 = pneg %p97
        %s381 = sand.u32 %s27, 1
        %s382 = scalar_lea.sflag [#allocation9], %s381
        %s383 = sand.u32 %s113, 1
        %s384 = smul.addr %s383, 64
        %s385 = scalar_lea.vmem [#allocation8], %s384
        %p386 = pneg %p126
        %p387 = pneg %p123
        %p388 = pneg %p147
        %p389 = pneg %p144
        %p390 = pneg %p168
        %p391 = pneg %p165
        %p392 = pneg %p194
        %p393 = pneg %p191
        %s394 = smul.u32 16, %s27
        %p395 = scmp.lt.s32.totalorder %s394, 31
        %s396 = scalar_select %p395, %s394, 31
        %s397 = smul.addr %s396, 8
        %s398 = scalar_lea.vmem %s6, %s397
        %s399 = smul.u32 16, %s27
        %s400 = smul.u32 16, %s27
        %s401 = smul.u32 16, %s27
        %s402 = smul.u32 16, %s27
        %s403 = smul.u32 16, %s27
        %p404 = scmp.lt.s32.totalorder %s403, 31
        %s405 = scalar_select %p404, %s403, 31
        %s406 = smul.addr %s405, 8
        %s407 = scalar_lea.vmem %s6, %s406
        %s408 = smul.u32 16, %s27
        %v410 = vld [vmem:[#allocation10] sm:$0xf]
        %v411 = vld [vmem:[#allocation10 + $0x4] sm:$0xf]
        %v412 = vld [vmem:[#allocation10 + $0x8] sm:$0xf]
        %v413 = vld [vmem:[#allocation10 + $0xc] sm:$0xf]
        %v414 = vld [vmem:[#allocation10 + $0x10] sm:$0xf]
        %v415 = vld [vmem:[#allocation10 + $0x14] sm:$0xf]
        %v416 = vld [vmem:[#allocation10 + $0x18] sm:$0xf]
        %v417 = vld [vmem:[#allocation10 + $0x1c] sm:$0xf]
        %v418 = vld [vmem:[#allocation10 + $0x20] sm:$0xf]
        %v419 = vld [vmem:[#allocation10 + $0x24] sm:$0xf]
        %v420 = vld [vmem:[#allocation10 + $0x28] sm:$0xf]
        %v421 = vld [vmem:[#allocation10 + $0x2c] sm:$0xf]
        %v422 = vld [vmem:[#allocation10 + $0x30] sm:$0xf]
        %v423 = vld [vmem:[#allocation10 + $0x34] sm:$0xf]
        %v424 = vld [vmem:[#allocation10 + $0x38] sm:$0xf]
        %v425 = vld [vmem:[#allocation10 + $0x3c] sm:$0xf]
        %s426 = sld [smem:[#allocation2]]
        %v427 = vld [vmem:[%s342] sm:$0xf]
        %v428 = vld [vmem:[%s342 + $0x4] sm:$0xf]
        %v429 = vld [vmem:[%s342 + $0x8] sm:$0xf]
        %v430 = vld [vmem:[%s342 + $0xc] sm:$0xf]
        %v431 = vld [vmem:[%s342 + $0x10] sm:$0xf]
        %v432 = vld [vmem:[%s342 + $0x14] sm:$0xf]
        %v433 = vld [vmem:[%s342 + $0x18] sm:$0xf]
        %v434 = vld [vmem:[%s342 + $0x1c] sm:$0xf]
        %v435 = vld [vmem:[%s342 + $0x20] sm:$0xf]
        %v436 = vld [vmem:[%s342 + $0x24] sm:$0xf]
        %v437 = vld [vmem:[%s342 + $0x28] sm:$0xf]
        %v438 = vld [vmem:[%s342 + $0x2c] sm:$0xf]
        %v439 = vld [vmem:[%s342 + $0x30] sm:$0xf]
        %v440 = vld [vmem:[%s342 + $0x34] sm:$0xf]
        %v441 = vld [vmem:[%s342 + $0x38] sm:$0xf]
        %v442 = vld [vmem:[%s342 + $0x3c] sm:$0xf]
        %v443 = vunpack.c.l.bf16 %v427
        %v444 = vunpack.c.l.bf16 %v428
        %v445 = vunpack.c.l.bf16 %v429
        %v446 = vunpack.c.l.bf16 %v430
        %v447 = vunpack.c.l.bf16 %v431
        %v448 = vunpack.c.l.bf16 %v432
        %v449 = vunpack.c.l.bf16 %v433
        %v450 = vunpack.c.l.bf16 %v434
        %v451 = vunpack.c.l.bf16 %v435
        %v452 = vunpack.c.l.bf16 %v436
        %v453 = vunpack.c.l.bf16 %v437
        %v454 = vunpack.c.l.bf16 %v438
        %v455 = vunpack.c.l.bf16 %v439
        %v456 = vunpack.c.l.bf16 %v440
        %v457 = vunpack.c.l.bf16 %v441
        %v458 = vunpack.c.l.bf16 %v442
        %v459 = vld [vmem:[%s351] sm:$0xf]
        %v460 = vld [vmem:[%s351 + $0x4] sm:$0xf]
        %v461 = vld [vmem:[%s351 + $0x8] sm:$0xf]
        %v462 = vld [vmem:[%s351 + $0xc] sm:$0xf]
        %v463 = vld [vmem:[%s351 + $0x10] sm:$0xf]
        %v464 = vld [vmem:[%s351 + $0x14] sm:$0xf]
        %v465 = vld [vmem:[%s351 + $0x18] sm:$0xf]
        %v466 = vld [vmem:[%s351 + $0x1c] sm:$0xf]
        %v467 = vld [vmem:[%s351 + $0x20] sm:$0xf]
        %v468 = vld [vmem:[%s351 + $0x24] sm:$0xf]
        %v469 = vld [vmem:[%s351 + $0x28] sm:$0xf]
        %v470 = vld [vmem:[%s351 + $0x2c] sm:$0xf]
        %v471 = vld [vmem:[%s351 + $0x30] sm:$0xf]
        %v472 = vld [vmem:[%s351 + $0x34] sm:$0xf]
        %v473 = vld [vmem:[%s351 + $0x38] sm:$0xf]
        %v474 = vld [vmem:[%s351 + $0x3c] sm:$0xf]
        %v475 = vunpack.c.l.bf16 %v459
        %v476 = vunpack.c.l.bf16 %v460
        %v477 = vunpack.c.l.bf16 %v461
        %v478 = vunpack.c.l.bf16 %v462
        %v479 = vunpack.c.l.bf16 %v463
        %v480 = vunpack.c.l.bf16 %v464
        %v481 = vunpack.c.l.bf16 %v465
        %v482 = vunpack.c.l.bf16 %v466
        %v483 = vunpack.c.l.bf16 %v467
        %v484 = vunpack.c.l.bf16 %v468
        %v485 = vunpack.c.l.bf16 %v469
        %v486 = vunpack.c.l.bf16 %v470
        %v487 = vunpack.c.l.bf16 %v471
        %v488 = vunpack.c.l.bf16 %v472
        %v489 = vunpack.c.l.bf16 %v473
        %v490 = vunpack.c.l.bf16 %v474
        %v491 = vld [vmem:[%s324] sm:$0xf]
        %v492 = vld [vmem:[%s324 + $0x4] sm:$0xf]
        %v493 = vld [vmem:[%s324 + $0x8] sm:$0xf]
        %v494 = vld [vmem:[%s324 + $0xc] sm:$0xf]
        %v495 = vld [vmem:[%s324 + $0x10] sm:$0xf]
        %v496 = vld [vmem:[%s324 + $0x14] sm:$0xf]
        %v497 = vld [vmem:[%s324 + $0x18] sm:$0xf]
        %v498 = vld [vmem:[%s324 + $0x1c] sm:$0xf]
        %v499 = vld [vmem:[%s324 + $0x20] sm:$0xf]
        %v500 = vld [vmem:[%s324 + $0x24] sm:$0xf]
        %v501 = vld [vmem:[%s324 + $0x28] sm:$0xf]
        %v502 = vld [vmem:[%s324 + $0x2c] sm:$0xf]
        %v503 = vld [vmem:[%s324 + $0x30] sm:$0xf]
        %v504 = vld [vmem:[%s324 + $0x34] sm:$0xf]
        %v505 = vld [vmem:[%s324 + $0x38] sm:$0xf]
        %v506 = vld [vmem:[%s324 + $0x3c] sm:$0xf]
        %v523 = vunpack.c.l.b16 %v491
        %v524 = vunpack.c.l.b16 %v492
        %v525 = vunpack.c.l.b16 %v493
        %v526 = vunpack.c.l.b16 %v494
        %v527 = vunpack.c.l.b16 %v495
        %v528 = vunpack.c.l.b16 %v496
        %v529 = vunpack.c.l.b16 %v497
        %v530 = vunpack.c.l.b16 %v498
        %v531 = vunpack.c.l.b16 %v499
        %v532 = vunpack.c.l.b16 %v500
        %v533 = vunpack.c.l.b16 %v501
        %v534 = vunpack.c.l.b16 %v502
        %v535 = vunpack.c.l.b16 %v503
        %v536 = vunpack.c.l.b16 %v504
        %v537 = vunpack.c.l.b16 %v505
        %v538 = vunpack.c.l.b16 %v506
        %v539 = vpack.c.b16 %v524, %v523
        %v540 = vpack.c.b16 %v526, %v525
        %v541 = vpack.c.b16 %v528, %v527
        %v542 = vpack.c.b16 %v530, %v529
        %v543 = vpack.c.b16 %v532, %v531
        %v544 = vpack.c.b16 %v534, %v533
        %v545 = vpack.c.b16 %v536, %v535
        %v546 = vpack.c.b16 %v538, %v537
        %v571 = vunpack.c.l.b16 %v410
        %v572 = vunpack.c.l.b16 %v411
        %v573 = vunpack.c.l.b16 %v412
        %v574 = vunpack.c.l.b16 %v413
        %v575 = vunpack.c.l.b16 %v414
        %v576 = vunpack.c.l.b16 %v415
        %v577 = vunpack.c.l.b16 %v416
        %v578 = vunpack.c.l.b16 %v417
        %v579 = vunpack.c.l.b16 %v418
        %v580 = vunpack.c.l.b16 %v419
        %v581 = vunpack.c.l.b16 %v420
        %v582 = vunpack.c.l.b16 %v421
        %v583 = vunpack.c.l.b16 %v422
        %v584 = vunpack.c.l.b16 %v423
        %v585 = vunpack.c.l.b16 %v424
        %v586 = vunpack.c.l.b16 %v425
        %v587 = vpack.c.b16 %v572, %v571
        %v588 = vpack.c.b16 %v574, %v573
        %v589 = vpack.c.b16 %v576, %v575
        %v590 = vpack.c.b16 %v578, %v577
        %v591 = vpack.c.b16 %v580, %v579
        %v592 = vpack.c.b16 %v582, %v581
        %v593 = vpack.c.b16 %v584, %v583
        %v594 = vpack.c.b16 %v586, %v585
        %603 = vmatprep.subr.bf16.mxu0 0
        %604 = vmatpush1.bf16.msra.mxu0 %v594
        %605 = vmatprep.subr.bf16.mxu0 0
        %606 = vmatpush1.bf16.msra.mxu0 %v593
        %607 = vmatprep.subr.bf16.mxu0 0
        %608 = vmatpush1.bf16.msra.mxu0 %v592
        %609 = vmatprep.subr.bf16.mxu0 0
        %610 = vmatpush1.bf16.msra.mxu0 %v591
        %611 = vmatprep.subr.bf16.mxu0 0
        %612 = vmatpush1.bf16.msra.mxu0 %v590
        %613 = vmatprep.subr.bf16.mxu0 0
        %614 = vmatpush1.bf16.msra.mxu0 %v589
        %615 = vmatprep.subr.bf16.mxu0 0
        %616 = vmatpush1.bf16.msra.mxu0 %v588
        %617 = vmatprep.subr.bf16.mxu0 0
        %618 = vmatpush1.bf16.msra.mxu0 %v587
        %619 = vmatprep.subr.bf16.mxu0 0
        %620 = vmatpush2.bf16.msra.mxu0 0
        %621 = vmatprep.subr.bf16.mxu0 0
        %622 = vmatpush2.bf16.msra.mxu0 0
        %623 = vmatprep.subr.bf16.mxu0 0
        %624 = vmatpush2.bf16.msra.mxu0 0
        %625 = vmatprep.subr.bf16.mxu0 0
        %626 = vmatpush2.bf16.msra.mxu0 0
        %627 = vmatprep.subr.bf16.mxu0 0
        %628 = vmatpush2.bf16.msra.mxu0 0
        %629 = vmatprep.subr.bf16.mxu0 0
        %630 = vmatpush2.bf16.msra.mxu0 0
        %631 = vmatprep.subr.bf16.mxu0 0
        %632 = vmatpush2.bf16.msra.mxu0 0
        %633 = vmatprep.subr.bf16.mxu0 0
        %634 = vmatpush2.bf16.msra.mxu0 0
        %635 = vmatprep.mubr.bf16.mxu0 0
        %636 = vmatmul.mubr.bf16.gmra.mxu0 %v539
        %v637 = vpop.f32.mrf.mxu0
        %v638 = vadd.f32 0.0, %v637
        %v639 = vpop.f32.mrf.mxu0
        %v640 = vpop.f32.mrf.mxu0
        %v641 = vadd.f32 0.0, %v640
        %v642 = vpop.f32.mrf.mxu0
        %643 = vmatprep.mubr.bf16.mxu0 0
        %644 = vmatmul.mubr.bf16.gmra.mxu0 %v540
        %v645 = vpop.f32.mrf.mxu0
        %v646 = vadd.f32 0.0, %v645
        %v647 = vpop.f32.mrf.mxu0
        %v648 = vpop.f32.mrf.mxu0
        %v649 = vadd.f32 0.0, %v648
        %v650 = vpop.f32.mrf.mxu0
        %651 = vmatprep.mubr.bf16.mxu0 0
        %652 = vmatmul.mubr.bf16.gmra.mxu0 %v541
        %v653 = vpop.f32.mrf.mxu0
        %v654 = vadd.f32 0.0, %v653
        %v655 = vpop.f32.mrf.mxu0
        %v656 = vpop.f32.mrf.mxu0
        %v657 = vadd.f32 0.0, %v656
        %v658 = vpop.f32.mrf.mxu0
        %659 = vmatprep.mubr.bf16.mxu0 0
        %660 = vmatmul.mubr.bf16.gmra.mxu0 %v542
        %v661 = vpop.f32.mrf.mxu0
        %v662 = vadd.f32 0.0, %v661
        %v663 = vpop.f32.mrf.mxu0
        %v664 = vpop.f32.mrf.mxu0
        %v665 = vadd.f32 0.0, %v664
        %v666 = vpop.f32.mrf.mxu0
        %667 = vmatprep.mubr.bf16.mxu0 0
        %668 = vmatmul.mubr.bf16.gmra.mxu0 %v543
        %v669 = vpop.f32.mrf.mxu0
        %v670 = vadd.f32 0.0, %v669
        %v671 = vpop.f32.mrf.mxu0
        %v672 = vpop.f32.mrf.mxu0
        %v673 = vadd.f32 0.0, %v672
        %v674 = vpop.f32.mrf.mxu0
        %675 = vmatprep.mubr.bf16.mxu0 0
        %676 = vmatmul.mubr.bf16.gmra.mxu0 %v544
        %v677 = vpop.f32.mrf.mxu0
        %v678 = vadd.f32 0.0, %v677
        %v679 = vpop.f32.mrf.mxu0
        %v680 = vpop.f32.mrf.mxu0
        %v681 = vadd.f32 0.0, %v680
        %v682 = vpop.f32.mrf.mxu0
        %683 = vmatprep.mubr.bf16.mxu0 0
        %684 = vmatmul.mubr.bf16.gmra.mxu0 %v545
        %v685 = vpop.f32.mrf.mxu0
        %v686 = vadd.f32 0.0, %v685
        %v687 = vpop.f32.mrf.mxu0
        %v688 = vpop.f32.mrf.mxu0
        %v689 = vadd.f32 0.0, %v688
        %v690 = vpop.f32.mrf.mxu0
        %691 = vmatprep.mubr.bf16.mxu0 0
        %692 = vmatmul.mubr.bf16.gmra.mxu0 %v546
        %v693 = vpop.f32.mrf.mxu0
        %v694 = vadd.f32 0.0, %v693
        %v695 = vpop.f32.mrf.mxu0
        %v696 = vpop.f32.mrf.mxu0
        %v697 = vadd.f32 0.0, %v696
        %v698 = vpop.f32.mrf.mxu0
        %699 = vdwg.mxu0
        %v700 = vmul.f32 %v638, %v443
        %v701 = vmul.f32 %v641, %v444
        %v702 = vmul.f32 %v646, %v445
        %v703 = vmul.f32 %v649, %v446
        %v704 = vmul.f32 %v654, %v447
        %v705 = vmul.f32 %v657, %v448
        %v706 = vmul.f32 %v662, %v449
        %v707 = vmul.f32 %v665, %v450
        %v708 = vmul.f32 %v670, %v451
        %v709 = vmul.f32 %v673, %v452
        %v710 = vmul.f32 %v678, %v453
        %v711 = vmul.f32 %v681, %v454
        %v712 = vmul.f32 %v686, %v455
        %v713 = vmul.f32 %v689, %v456
        %v714 = vmul.f32 %v694, %v457
        %v715 = vmul.f32 %v697, %v458
        %716 = vadd.xlane.f32.xlu0 %v700
        %v717 = vpop.xlane.xlu0 %716
        %718 = vadd.xlane.f32.xlu0 %v701
        %v719 = vpop.xlane.xlu0 %718
        %720 = vadd.xlane.f32.xlu0 %v702
        %v721 = vpop.xlane.xlu0 %720
        %722 = vadd.xlane.f32.xlu0 %v703
        %v723 = vpop.xlane.xlu0 %722
        %724 = vadd.xlane.f32.xlu0 %v704
        %v725 = vpop.xlane.xlu0 %724
        %726 = vadd.xlane.f32.xlu0 %v705
        %v727 = vpop.xlane.xlu0 %726
        %728 = vadd.xlane.f32.xlu0 %v706
        %v729 = vpop.xlane.xlu0 %728
        %730 = vadd.xlane.f32.xlu0 %v707
        %v731 = vpop.xlane.xlu0 %730
        %732 = vadd.xlane.f32.xlu0 %v708
        %v733 = vpop.xlane.xlu0 %732
        %734 = vadd.xlane.f32.xlu0 %v709
        %v735 = vpop.xlane.xlu0 %734
        %736 = vadd.xlane.f32.xlu0 %v710
        %v737 = vpop.xlane.xlu0 %736
        %738 = vadd.xlane.f32.xlu0 %v711
        %v739 = vpop.xlane.xlu0 %738
        %740 = vadd.xlane.f32.xlu0 %v712
        %v741 = vpop.xlane.xlu0 %740
        %742 = vadd.xlane.f32.xlu0 %v713
        %v743 = vpop.xlane.xlu0 %742
        %744 = vadd.xlane.f32.xlu0 %v714
        %v745 = vpop.xlane.xlu0 %744
        %746 = vadd.xlane.f32.xlu0 %v715
        %v747 = vpop.xlane.xlu0 %746
        %v748 = vstv %s426
        %v749 = vadd.f32 %v717, %v748
        %v750 = vadd.f32 %v719, %v748
        %v751 = vadd.f32 %v721, %v748
        %v752 = vadd.f32 %v723, %v748
        %v753 = vadd.f32 %v725, %v748
        %v754 = vadd.f32 %v727, %v748
        %v755 = vadd.f32 %v729, %v748
        %v756 = vadd.f32 %v731, %v748
        %v757 = vadd.f32 %v733, %v748
        %v758 = vadd.f32 %v735, %v748
        %v759 = vadd.f32 %v737, %v748
        %v760 = vadd.f32 %v739, %v748
        %v761 = vadd.f32 %v741, %v748
        %v762 = vadd.f32 %v743, %v748
        %v763 = vadd.f32 %v745, %v748
        %v764 = vadd.f32 %v747, %v748
        %v765 = vmul.f32 %v638, %v475
        %v766 = vmul.f32 %v641, %v476
        %v767 = vmul.f32 %v646, %v477
        %v768 = vmul.f32 %v649, %v478
        %v769 = vmul.f32 %v654, %v479
        %v770 = vmul.f32 %v657, %v480
        %v771 = vmul.f32 %v662, %v481
        %v772 = vmul.f32 %v665, %v482
        %v773 = vmul.f32 %v670, %v483
        %v774 = vmul.f32 %v673, %v484
        %v775 = vmul.f32 %v678, %v485
        %v776 = vmul.f32 %v681, %v486
        %v777 = vmul.f32 %v686, %v487
        %v778 = vmul.f32 %v689, %v488
        %v779 = vmul.f32 %v694, %v489
        %v780 = vmul.f32 %v697, %v490
        %781 = vadd.xlane.f32.xlu0 %v765
        %v782 = vpop.xlane.xlu0 %781
        %783 = vadd.xlane.f32.xlu0 %v766
        %v784 = vpop.xlane.xlu0 %783
        %785 = vadd.xlane.f32.xlu0 %v767
        %v786 = vpop.xlane.xlu0 %785
        %787 = vadd.xlane.f32.xlu0 %v768
        %v788 = vpop.xlane.xlu0 %787
        %789 = vadd.xlane.f32.xlu0 %v769
        %v790 = vpop.xlane.xlu0 %789
        %791 = vadd.xlane.f32.xlu0 %v770
        %v792 = vpop.xlane.xlu0 %791
        %793 = vadd.xlane.f32.xlu0 %v771
        %v794 = vpop.xlane.xlu0 %793
        %795 = vadd.xlane.f32.xlu0 %v772
        %v796 = vpop.xlane.xlu0 %795
        %797 = vadd.xlane.f32.xlu0 %v773
        %v798 = vpop.xlane.xlu0 %797
        %799 = vadd.xlane.f32.xlu0 %v774
        %v800 = vpop.xlane.xlu0 %799
        %801 = vadd.xlane.f32.xlu0 %v775
        %v802 = vpop.xlane.xlu0 %801
        %803 = vadd.xlane.f32.xlu0 %v776
        %v804 = vpop.xlane.xlu0 %803
        %805 = vadd.xlane.f32.xlu0 %v777
        %v806 = vpop.xlane.xlu0 %805
        %807 = vadd.xlane.f32.xlu0 %v778
        %v808 = vpop.xlane.xlu0 %807
        %809 = vadd.xlane.f32.xlu0 %v779
        %v810 = vpop.xlane.xlu0 %809
        %811 = vadd.xlane.f32.xlu0 %v780
        %v812 = vpop.xlane.xlu0 %811
        %v813 = vadd.f32 %v782, %v748
        %v814 = vadd.f32 %v784, %v748
        %v815 = vadd.f32 %v786, %v748
        %v816 = vadd.f32 %v788, %v748
        %v817 = vadd.f32 %v790, %v748
        %v818 = vadd.f32 %v792, %v748
        %v819 = vadd.f32 %v794, %v748
        %v820 = vadd.f32 %v796, %v748
        %v821 = vadd.f32 %v798, %v748
        %v822 = vadd.f32 %v800, %v748
        %v823 = vadd.f32 %v802, %v748
        %v824 = vadd.f32 %v804, %v748
        %v825 = vadd.f32 %v806, %v748
        %v826 = vadd.f32 %v808, %v748
        %v827 = vadd.f32 %v810, %v748
        %v828 = vadd.f32 %v812, %v748
        %v829 = vld [vmem:[%s333] sm:$0xf]
        %v830 = vld [vmem:[%s333 + $0x4] sm:$0xf]
        %v831 = vld [vmem:[%s333 + $0x8] sm:$0xf]
        %v832 = vld [vmem:[%s333 + $0xc] sm:$0xf]
        %v833 = vld [vmem:[%s333 + $0x10] sm:$0xf]
        %v834 = vld [vmem:[%s333 + $0x14] sm:$0xf]
        %v835 = vld [vmem:[%s333 + $0x18] sm:$0xf]
        %v836 = vld [vmem:[%s333 + $0x1c] sm:$0xf]
        %v837 = vld [vmem:[%s333 + $0x20] sm:$0xf]
        %v838 = vld [vmem:[%s333 + $0x24] sm:$0xf]
        %v839 = vld [vmem:[%s333 + $0x28] sm:$0xf]
        %v840 = vld [vmem:[%s333 + $0x2c] sm:$0xf]
        %v841 = vld [vmem:[%s333 + $0x30] sm:$0xf]
        %v842 = vld [vmem:[%s333 + $0x34] sm:$0xf]
        %v843 = vld [vmem:[%s333 + $0x38] sm:$0xf]
        %v844 = vld [vmem:[%s333 + $0x3c] sm:$0xf]
        %v861 = vunpack.c.l.b16 %v829
        %v862 = vunpack.c.l.b16 %v830
        %v863 = vunpack.c.l.b16 %v831
        %v864 = vunpack.c.l.b16 %v832
        %v865 = vunpack.c.l.b16 %v833
        %v866 = vunpack.c.l.b16 %v834
        %v867 = vunpack.c.l.b16 %v835
        %v868 = vunpack.c.l.b16 %v836
        %v869 = vunpack.c.l.b16 %v837
        %v870 = vunpack.c.l.b16 %v838
        %v871 = vunpack.c.l.b16 %v839
        %v872 = vunpack.c.l.b16 %v840
        %v873 = vunpack.c.l.b16 %v841
        %v874 = vunpack.c.l.b16 %v842
        %v875 = vunpack.c.l.b16 %v843
        %v876 = vunpack.c.l.b16 %v844
        %v877 = vpack.c.b16 %v862, %v861
        %v878 = vpack.c.b16 %v864, %v863
        %v879 = vpack.c.b16 %v866, %v865
        %v880 = vpack.c.b16 %v868, %v867
        %v881 = vpack.c.b16 %v870, %v869
        %v882 = vpack.c.b16 %v872, %v871
        %v883 = vpack.c.b16 %v874, %v873
        %v884 = vpack.c.b16 %v876, %v875
        %893 = vmatprep.subr.bf16.mxu0 0
        %894 = vmatpush1.bf16.msra.mxu0 %v594
        %895 = vmatprep.subr.bf16.mxu0 0
        %896 = vmatpush1.bf16.msra.mxu0 %v593
        %897 = vmatprep.subr.bf16.mxu0 0
        %898 = vmatpush1.bf16.msra.mxu0 %v592
        %899 = vmatprep.subr.bf16.mxu0 0
        %900 = vmatpush1.bf16.msra.mxu0 %v591
        %901 = vmatprep.subr.bf16.mxu0 0
        %902 = vmatpush1.bf16.msra.mxu0 %v590
        %903 = vmatprep.subr.bf16.mxu0 0
        %904 = vmatpush1.bf16.msra.mxu0 %v589
        %905 = vmatprep.subr.bf16.mxu0 0
        %906 = vmatpush1.bf16.msra.mxu0 %v588
        %907 = vmatprep.subr.bf16.mxu0 0
        %908 = vmatpush1.bf16.msra.mxu0 %v587
        %909 = vmatprep.subr.bf16.mxu0 0
        %910 = vmatpush2.bf16.msra.mxu0 0
        %911 = vmatprep.subr.bf16.mxu0 0
        %912 = vmatpush2.bf16.msra.mxu0 0
        %913 = vmatprep.subr.bf16.mxu0 0
        %914 = vmatpush2.bf16.msra.mxu0 0
        %915 = vmatprep.subr.bf16.mxu0 0
        %916 = vmatpush2.bf16.msra.mxu0 0
        %917 = vmatprep.subr.bf16.mxu0 0
        %918 = vmatpush2.bf16.msra.mxu0 0
        %919 = vmatprep.subr.bf16.mxu0 0
        %920 = vmatpush2.bf16.msra.mxu0 0
        %921 = vmatprep.subr.bf16.mxu0 0
        %922 = vmatpush2.bf16.msra.mxu0 0
        %923 = vmatprep.subr.bf16.mxu0 0
        %924 = vmatpush2.bf16.msra.mxu0 0
        %925 = vmatprep.mubr.bf16.mxu0 0
        %926 = vmatmul.mubr.bf16.gmra.mxu0 %v877
        %v927 = vpop.f32.mrf.mxu0
        %v928 = vadd.f32 0.0, %v927
        %v929 = vpop.f32.mrf.mxu0
        %v930 = vpop.f32.mrf.mxu0
        %v931 = vadd.f32 0.0, %v930
        %v932 = vpop.f32.mrf.mxu0
        %933 = vmatprep.mubr.bf16.mxu0 0
        %934 = vmatmul.mubr.bf16.gmra.mxu0 %v878
        %v935 = vpop.f32.mrf.mxu0
        %v936 = vadd.f32 0.0, %v935
        %v937 = vpop.f32.mrf.mxu0
        %v938 = vpop.f32.mrf.mxu0
        %v939 = vadd.f32 0.0, %v938
        %v940 = vpop.f32.mrf.mxu0
        %941 = vmatprep.mubr.bf16.mxu0 0
        %942 = vmatmul.mubr.bf16.gmra.mxu0 %v879
        %v943 = vpop.f32.mrf.mxu0
        %v944 = vadd.f32 0.0, %v943
        %v945 = vpop.f32.mrf.mxu0
        %v946 = vpop.f32.mrf.mxu0
        %v947 = vadd.f32 0.0, %v946
        %v948 = vpop.f32.mrf.mxu0
        %949 = vmatprep.mubr.bf16.mxu0 0
        %950 = vmatmul.mubr.bf16.gmra.mxu0 %v880
        %v951 = vpop.f32.mrf.mxu0
        %v952 = vadd.f32 0.0, %v951
        %v953 = vpop.f32.mrf.mxu0
        %v954 = vpop.f32.mrf.mxu0
        %v955 = vadd.f32 0.0, %v954
        %v956 = vpop.f32.mrf.mxu0
        %957 = vmatprep.mubr.bf16.mxu0 0
        %958 = vmatmul.mubr.bf16.gmra.mxu0 %v881
        %v959 = vpop.f32.mrf.mxu0
        %v960 = vadd.f32 0.0, %v959
        %v961 = vpop.f32.mrf.mxu0
        %v962 = vpop.f32.mrf.mxu0
        %v963 = vadd.f32 0.0, %v962
        %v964 = vpop.f32.mrf.mxu0
        %965 = vmatprep.mubr.bf16.mxu0 0
        %966 = vmatmul.mubr.bf16.gmra.mxu0 %v882
        %v967 = vpop.f32.mrf.mxu0
        %v968 = vadd.f32 0.0, %v967
        %v969 = vpop.f32.mrf.mxu0
        %v970 = vpop.f32.mrf.mxu0
        %v971 = vadd.f32 0.0, %v970
        %v972 = vpop.f32.mrf.mxu0
        %973 = vmatprep.mubr.bf16.mxu0 0
        %974 = vmatmul.mubr.bf16.gmra.mxu0 %v883
        %v975 = vpop.f32.mrf.mxu0
        %v976 = vadd.f32 0.0, %v975
        %v977 = vpop.f32.mrf.mxu0
        %v978 = vpop.f32.mrf.mxu0
        %v979 = vadd.f32 0.0, %v978
        %v980 = vpop.f32.mrf.mxu0
        %981 = vmatprep.mubr.bf16.mxu0 0
        %982 = vmatmul.mubr.bf16.gmra.mxu0 %v884
        %v983 = vpop.f32.mrf.mxu0
        %v984 = vadd.f32 0.0, %v983
        %v985 = vpop.f32.mrf.mxu0
        %v986 = vpop.f32.mrf.mxu0
        %v987 = vadd.f32 0.0, %v986
        %v988 = vpop.f32.mrf.mxu0
        %989 = vdwg.mxu0
        %v990 = vmul.f32 %v928, %v443
        %v991 = vmul.f32 %v931, %v444
        %v992 = vmul.f32 %v936, %v445
        %v993 = vmul.f32 %v939, %v446
        %v994 = vmul.f32 %v944, %v447
        %v995 = vmul.f32 %v947, %v448
        %v996 = vmul.f32 %v952, %v449
        %v997 = vmul.f32 %v955, %v450
        %v998 = vmul.f32 %v960, %v451
        %v999 = vmul.f32 %v963, %v452
        %v1000 = vmul.f32 %v968, %v453
        %v1001 = vmul.f32 %v971, %v454
        %v1002 = vmul.f32 %v976, %v455
        %v1003 = vmul.f32 %v979, %v456
        %v1004 = vmul.f32 %v984, %v457
        %v1005 = vmul.f32 %v987, %v458
        %1006 = vadd.xlane.f32.xlu0 %v990
        %v1007 = vpop.xlane.xlu0 %1006
        %1008 = vadd.xlane.f32.xlu0 %v991
        %v1009 = vpop.xlane.xlu0 %1008
        %1010 = vadd.xlane.f32.xlu0 %v992
        %v1011 = vpop.xlane.xlu0 %1010
        %1012 = vadd.xlane.f32.xlu0 %v993
        %v1013 = vpop.xlane.xlu0 %1012
        %1014 = vadd.xlane.f32.xlu0 %v994
        %v1015 = vpop.xlane.xlu0 %1014
        %1016 = vadd.xlane.f32.xlu0 %v995
        %v1017 = vpop.xlane.xlu0 %1016
        %1018 = vadd.xlane.f32.xlu0 %v996
        %v1019 = vpop.xlane.xlu0 %1018
        %1020 = vadd.xlane.f32.xlu0 %v997
        %v1021 = vpop.xlane.xlu0 %1020
        %1022 = vadd.xlane.f32.xlu0 %v998
        %v1023 = vpop.xlane.xlu0 %1022
        %1024 = vadd.xlane.f32.xlu0 %v999
        %v1025 = vpop.xlane.xlu0 %1024
        %1026 = vadd.xlane.f32.xlu0 %v1000
        %v1027 = vpop.xlane.xlu0 %1026
        %1028 = vadd.xlane.f32.xlu0 %v1001
        %v1029 = vpop.xlane.xlu0 %1028
        %1030 = vadd.xlane.f32.xlu0 %v1002
        %v1031 = vpop.xlane.xlu0 %1030
        %1032 = vadd.xlane.f32.xlu0 %v1003
        %v1033 = vpop.xlane.xlu0 %1032
        %1034 = vadd.xlane.f32.xlu0 %v1004
        %v1035 = vpop.xlane.xlu0 %1034
        %1036 = vadd.xlane.f32.xlu0 %v1005
        %v1037 = vpop.xlane.xlu0 %1036
        %v1038 = vadd.f32 %v1007, %v748
        %v1039 = vadd.f32 %v1009, %v748
        %v1040 = vadd.f32 %v1011, %v748
        %v1041 = vadd.f32 %v1013, %v748
        %v1042 = vadd.f32 %v1015, %v748
        %v1043 = vadd.f32 %v1017, %v748
        %v1044 = vadd.f32 %v1019, %v748
        %v1045 = vadd.f32 %v1021, %v748
        %v1046 = vadd.f32 %v1023, %v748
        %v1047 = vadd.f32 %v1025, %v748
        %v1048 = vadd.f32 %v1027, %v748
        %v1049 = vadd.f32 %v1029, %v748
        %v1050 = vadd.f32 %v1031, %v748
        %v1051 = vadd.f32 %v1033, %v748
        %v1052 = vadd.f32 %v1035, %v748
        %v1053 = vadd.f32 %v1037, %v748
        %v1054 = vmul.f32 %v928, %v475
        %v1055 = vmul.f32 %v931, %v476
        %v1056 = vmul.f32 %v936, %v477
        %v1057 = vmul.f32 %v939, %v478
        %v1058 = vmul.f32 %v944, %v479
        %v1059 = vmul.f32 %v947, %v480
        %v1060 = vmul.f32 %v952, %v481
        %v1061 = vmul.f32 %v955, %v482
        %v1062 = vmul.f32 %v960, %v483
        %v1063 = vmul.f32 %v963, %v484
        %v1064 = vmul.f32 %v968, %v485
        %v1065 = vmul.f32 %v971, %v486
        %v1066 = vmul.f32 %v976, %v487
        %v1067 = vmul.f32 %v979, %v488
        %v1068 = vmul.f32 %v984, %v489
        %v1069 = vmul.f32 %v987, %v490
        %1070 = vadd.xlane.f32.xlu0 %v1054
        %v1071 = vpop.xlane.xlu0 %1070
        %1072 = vadd.xlane.f32.xlu0 %v1055
        %v1073 = vpop.xlane.xlu0 %1072
        %1074 = vadd.xlane.f32.xlu0 %v1056
        %v1075 = vpop.xlane.xlu0 %1074
        %1076 = vadd.xlane.f32.xlu0 %v1057
        %v1077 = vpop.xlane.xlu0 %1076
        %1078 = vadd.xlane.f32.xlu0 %v1058
        %v1079 = vpop.xlane.xlu0 %1078
        %1080 = vadd.xlane.f32.xlu0 %v1059
        %v1081 = vpop.xlane.xlu0 %1080
        %1082 = vadd.xlane.f32.xlu0 %v1060
        %v1083 = vpop.xlane.xlu0 %1082
        %1084 = vadd.xlane.f32.xlu0 %v1061
        %v1085 = vpop.xlane.xlu0 %1084
        %1086 = vadd.xlane.f32.xlu0 %v1062
        %v1087 = vpop.xlane.xlu0 %1086
        %1088 = vadd.xlane.f32.xlu0 %v1063
        %v1089 = vpop.xlane.xlu0 %1088
        %1090 = vadd.xlane.f32.xlu0 %v1064
        %v1091 = vpop.xlane.xlu0 %1090
        %1092 = vadd.xlane.f32.xlu0 %v1065
        %v1093 = vpop.xlane.xlu0 %1092
        %1094 = vadd.xlane.f32.xlu0 %v1066
        %v1095 = vpop.xlane.xlu0 %1094
        %1096 = vadd.xlane.f32.xlu0 %v1067
        %v1097 = vpop.xlane.xlu0 %1096
        %1098 = vadd.xlane.f32.xlu0 %v1068
        %v1099 = vpop.xlane.xlu0 %1098
        %1100 = vadd.xlane.f32.xlu0 %v1069
        %v1101 = vpop.xlane.xlu0 %1100
        %v1102 = vadd.f32 %v1071, %v748
        %v1103 = vadd.f32 %v1073, %v748
        %v1104 = vadd.f32 %v1075, %v748
        %v1105 = vadd.f32 %v1077, %v748
        %v1106 = vadd.f32 %v1079, %v748
        %v1107 = vadd.f32 %v1081, %v748
        %v1108 = vadd.f32 %v1083, %v748
        %v1109 = vadd.f32 %v1085, %v748
        %v1110 = vadd.f32 %v1087, %v748
        %v1111 = vadd.f32 %v1089, %v748
        %v1112 = vadd.f32 %v1091, %v748
        %v1113 = vadd.f32 %v1093, %v748
        %v1114 = vadd.f32 %v1095, %v748
        %v1115 = vadd.f32 %v1097, %v748
        %v1116 = vadd.f32 %v1099, %v748
        %v1117 = vadd.f32 %v1101, %v748
        %vm1118 = vcmask 7168
        %1119 = vst.msk [vmem:[%s407] sm:$0xff] %vm1118, %v749
        %1120 = vst.msk [vmem:[%s407 + $0x8] sm:$0xff] %vm1118, %v750
        %1121 = vst.msk [vmem:[%s407 + $0x10] sm:$0xff] %vm1118, %v751
        %1122 = vst.msk [vmem:[%s407 + $0x18] sm:$0xff] %vm1118, %v752
        %1123 = vst.msk [vmem:[%s407 + $0x20] sm:$0xff] %vm1118, %v753
        %1124 = vst.msk [vmem:[%s407 + $0x28] sm:$0xff] %vm1118, %v754
        %1125 = vst.msk [vmem:[%s407 + $0x30] sm:$0xff] %vm1118, %v755
        %1126 = vst.msk [vmem:[%s407 + $0x38] sm:$0xff] %vm1118, %v756
        %1127 = vst.msk [vmem:[%s407 + $0x40] sm:$0xff] %vm1118, %v757
        %1128 = vst.msk [vmem:[%s407 + $0x48] sm:$0xff] %vm1118, %v758
        %1129 = vst.msk [vmem:[%s407 + $0x50] sm:$0xff] %vm1118, %v759
        %1130 = vst.msk [vmem:[%s407 + $0x58] sm:$0xff] %vm1118, %v760
        %1131 = vst.msk [vmem:[%s407 + $0x60] sm:$0xff] %vm1118, %v761
        %1132 = vst.msk [vmem:[%s407 + $0x68] sm:$0xff] %vm1118, %v762
        %1133 = vst.msk [vmem:[%s407 + $0x70] sm:$0xff] %vm1118, %v763
        %1134 = vst.msk [vmem:[%s407 + $0x78] sm:$0xff] %vm1118, %v764
        %vm1135 = vcmask 15368
        %1136 = vst.msk [vmem:[%s407] sm:$0xff] %vm1135, %v1038
        %1137 = vst.msk [vmem:[%s407 + $0x8] sm:$0xff] %vm1135, %v1039
        %1138 = vst.msk [vmem:[%s407 + $0x10] sm:$0xff] %vm1135, %v1040
        %1139 = vst.msk [vmem:[%s407 + $0x18] sm:$0xff] %vm1135, %v1041
        %1140 = vst.msk [vmem:[%s407 + $0x20] sm:$0xff] %vm1135, %v1042
        %1141 = vst.msk [vmem:[%s407 + $0x28] sm:$0xff] %vm1135, %v1043
        %1142 = vst.msk [vmem:[%s407 + $0x30] sm:$0xff] %vm1135, %v1044
        %1143 = vst.msk [vmem:[%s407 + $0x38] sm:$0xff] %vm1135, %v1045
        %1144 = vst.msk [vmem:[%s407 + $0x40] sm:$0xff] %vm1135, %v1046
        %1145 = vst.msk [vmem:[%s407 + $0x48] sm:$0xff] %vm1135, %v1047
        %1146 = vst.msk [vmem:[%s407 + $0x50] sm:$0xff] %vm1135, %v1048
        %1147 = vst.msk [vmem:[%s407 + $0x58] sm:$0xff] %vm1135, %v1049
        %1148 = vst.msk [vmem:[%s407 + $0x60] sm:$0xff] %vm1135, %v1050
        %1149 = vst.msk [vmem:[%s407 + $0x68] sm:$0xff] %vm1135, %v1051
        %1150 = vst.msk [vmem:[%s407 + $0x70] sm:$0xff] %vm1135, %v1052
        %1151 = vst.msk [vmem:[%s407 + $0x78] sm:$0xff] %vm1135, %v1053
        %vm1152 = vcmask 23568
        %1153 = vst.msk [vmem:[%s407] sm:$0xff] %vm1152, %v813
        %1154 = vst.msk [vmem:[%s407 + $0x8] sm:$0xff] %vm1152, %v814
        %1155 = vst.msk [vmem:[%s407 + $0x10] sm:$0xff] %vm1152, %v815
        %1156 = vst.msk [vmem:[%s407 + $0x18] sm:$0xff] %vm1152, %v816
        %1157 = vst.msk [vmem:[%s407 + $0x20] sm:$0xff] %vm1152, %v817
        %1158 = vst.msk [vmem:[%s407 + $0x28] sm:$0xff] %vm1152, %v818
        %1159 = vst.msk [vmem:[%s407 + $0x30] sm:$0xff] %vm1152, %v819
        %1160 = vst.msk [vmem:[%s407 + $0x38] sm:$0xff] %vm1152, %v820
        %1161 = vst.msk [vmem:[%s407 + $0x40] sm:$0xff] %vm1152, %v821
        %1162 = vst.msk [vmem:[%s407 + $0x48] sm:$0xff] %vm1152, %v822
        %1163 = vst.msk [vmem:[%s407 + $0x50] sm:$0xff] %vm1152, %v823
        %1164 = vst.msk [vmem:[%s407 + $0x58] sm:$0xff] %vm1152, %v824
        %1165 = vst.msk [vmem:[%s407 + $0x60] sm:$0xff] %vm1152, %v825
        %1166 = vst.msk [vmem:[%s407 + $0x68] sm:$0xff] %vm1152, %v826
        %1167 = vst.msk [vmem:[%s407 + $0x70] sm:$0xff] %vm1152, %v827
        %1168 = vst.msk [vmem:[%s407 + $0x78] sm:$0xff] %vm1152, %v828
        %vm1169 = vcmask 31768
        %1170 = vst.msk [vmem:[%s407] sm:$0xff] %vm1169, %v1102
        %1171 = vst.msk [vmem:[%s407 + $0x8] sm:$0xff] %vm1169, %v1103
        %1172 = vst.msk [vmem:[%s407 + $0x10] sm:$0xff] %vm1169, %v1104
        %1173 = vst.msk [vmem:[%s407 + $0x18] sm:$0xff] %vm1169, %v1105
        %1174 = vst.msk [vmem:[%s407 + $0x20] sm:$0xff] %vm1169, %v1106
        %1175 = vst.msk [vmem:[%s407 + $0x28] sm:$0xff] %vm1169, %v1107
        %1176 = vst.msk [vmem:[%s407 + $0x30] sm:$0xff] %vm1169, %v1108
        %1177 = vst.msk [vmem:[%s407 + $0x38] sm:$0xff] %vm1169, %v1109
        %1178 = vst.msk [vmem:[%s407 + $0x40] sm:$0xff] %vm1169, %v1110
        %1179 = vst.msk [vmem:[%s407 + $0x48] sm:$0xff] %vm1169, %v1111
        %1180 = vst.msk [vmem:[%s407 + $0x50] sm:$0xff] %vm1169, %v1112
        %1181 = vst.msk [vmem:[%s407 + $0x58] sm:$0xff] %vm1169, %v1113
        %1182 = vst.msk [vmem:[%s407 + $0x60] sm:$0xff] %vm1169, %v1114
        %1183 = vst.msk [vmem:[%s407 + $0x68] sm:$0xff] %vm1169, %v1115
        %1184 = vst.msk [vmem:[%s407 + $0x70] sm:$0xff] %vm1169, %v1116
        %1185 = vst.msk [vmem:[%s407 + $0x78] sm:$0xff] %vm1169, %v1117
        %s1186 = smul.u32 16, %s27
        %p1187 = scmp.lt.s32.totalorder %s1186, 31
        %s1188 = scalar_select %p1187, %s1186, 31
        %s1189 = smul.addr %s1188, 8
        %s1190 = scalar_lea.vmem %s6, %s1189
        // Predicated region
        $region65: #{bilinear_discriminator.1} parent=43 // pred_check
          %p1191 = pneg %p191
        $region66: #{bilinear_discriminator.1} parent=43 // pred_check_branch
          %1193 = sbr.rel (%p1191) target = $region68
        $region67: #{bilinear_discriminator.1} parent=43 // pred_region
          %s1194 = smul.u32 16, %s27
        $region68: #{bilinear_discriminator.1} parent=43 // pred_fallthru
          _
      $region44: #{bilinear_discriminator.1} parent=5 // pred_fallthru
        _
      %p1195 = scmp.le.s32.totalorder 2, %s22
      // Predicated region
      $region69: #{bilinear_discriminator.1} parent=5 // pred_check
        %p1196 = pneg %p1195
      $region70: #{bilinear_discriminator.1} parent=5 // pred_check_branch
        %1198 = sbr.rel (%p1196) target = $region72
      $region71: #{bilinear_discriminator.1} parent=5 // pred_region
        %s1199 = ssub.s32 %s22, 2
        // Predicated region
        $region73: #{bilinear_discriminator.1} parent=71 // pred_check
          %p1200 = pneg %p197
        $region74: #{bilinear_discriminator.1} parent=71 // pred_check_branch
          %1202 = sbr.rel (%p1200) target = $region76
        $region75: #{bilinear_discriminator.1} parent=71 // pred_region
          %s1203 = smul.u32 16, %s28
          %p1204 = scmp.lt.s32.totalorder %s1203, 31
          %s1205 = scalar_select %p1204, %s1203, 31
          %s1206 = smul.addr %s1205, 8
          %s1207 = scalar_lea.vmem %s6, %s1206
        $region76: #{bilinear_discriminator.1} parent=71 // pred_fallthru
          _
      $region72: #{bilinear_discriminator.1} parent=5 // pred_fallthru
        _
    $region6: #{bilinear_discriminator.1} parent=1 // loop_footer
      %s26 = sadd.s32 1, %s22
    $region7: #{bilinear_discriminator.1} parent=1 // loop_footer_branch
      %21 = sbr.rel target = $region3
    $region8: #{bilinear_discriminator.1} parent=1 // loop_exit
      _
    %1208 = vsyncpa [#allocation4], 1
    %s1209 = scalar_lea.sflag [#allocation4], 1
    %1210 = vsyncpa %s1209, 1
    %1211 = vsyncpa [#allocation6], 1
    %s1212 = scalar_lea.sflag [#allocation6], 1
    %1213 = vsyncpa %s1212, 1
    %1214 = vsyncpa [#allocation9], 1
    %s1215 = scalar_lea.sflag [#allocation9], 1
    %1216 = vsyncpa %s1215, 1

</llo_original>
